<compile_context>
chip_gen: v6e
topology: v6e:2x2x1
jax: 0.10.0
libtpu: 0.0.40
codegen_flags: <defaults>
</compile_context>

<pallas_src>
import functools

import jax
import jax.numpy as jnp
from jax import lax
from jax.experimental import pallas as pl
from jax.experimental.pallas import tpu as pltpu


def _targeted_loss_kernel(cond_ref, l_ref, lt_ref, z_ref, z2_ref, out_ref, *,
                          total_rows):
    """One grid step = one (batch, spatial-row-block) tile.

    cond/l/lt : (1, 1, TR, L) narrow int VMEM
    z, z2     : (1, C, TR, L) native dtype VMEM
    out       : (1, C, TR, L) f32 accumulator, resident across the spatial axis.
    """
    j = pl.program_id(1)

    @pl.when(j == 0)
    def _init():
        out_ref[...] = jnp.zeros_like(out_ref)

    zsum = z_ref[...].astype(jnp.float32) + z2_ref[...].astype(jnp.float32)
    l = l_ref[...].astype(jnp.int32)        # (1, 1, TR, L)
    lt = lt_ref[...].astype(jnp.int32)
    cond = cond_ref[...].astype(jnp.int32)

    _, C, TR, L = zsum.shape

    # Mask: pixel is selected by `condition` AND lies inside the real spatial
    # extent (ragged tail blocks over-read garbage rows; zero them here so no
    # wrapper padding of z / z2 is ever needed, and garbage NaNs can't leak).
    row = lax.broadcasted_iota(jnp.int32, (1, 1, TR, L), 2)
    keep = jnp.logical_and(cond != 0, (j * TR + row) < total_rows)

    zc = jnp.where(keep, zsum, 0.0)         # broadcast over channels
    ch = lax.broadcasted_iota(jnp.int32, (1, C, TR, L), 1)
    # Predicated accumulate: +zsum on the "good" channel, -zsum on the target.
    out_ref[...] += jnp.where(ch == l, zc, 0.0) - jnp.where(ch == lt, zc, 0.0)


def targeted_loss(z, z2, condition, l, l_target, *, max_lanes=32768):
    """Pallas wrapper. z, z2: (B, C, H, W); condition/l/l_target: (B, H, W).

    NOTE: labels are assumed to lie in [0, C); out-of-range labels (e.g. an
    ignore_index) contribute zero instead of erroring like torch fancy-indexing.
    """
    B, C, H, W = z.shape
    HW = H * W

    # Free spatial re-view: rows on the sublane axis, L on the lane axis.
    if HW % 128 == 0:
        R, L = HW // 128, 128
    else:
        R, L = H, W          # last block dim == full W is always legal

    z_bytes = jnp.dtype(z.dtype).itemsize
    z2_bytes = jnp.dtype(z2.dtype).itemsize
    lbl_dtype = jnp.int16 if C <= 32767 else jnp.int32
    lbl_bytes = jnp.dtype(lbl_dtype).itemsize

    # ---- auto-size the spatial tile against this generation's VMEM --------
    vmem_cap = 64 << 20
    try:
        info_fn = getattr(pltpu, "get_tpu_info", None)
        if info_fn is not None:
            cap = getattr(info_fn(), "vmem_capacity_bytes", None)
            if cap:
                vmem_cap = int(cap)
    except Exception:
        pass
    if vmem_cap < (48 << 20):
        vmem_cap = 64 << 20
    budget = max(16 << 20, min(vmem_cap // 3, 80 << 20))

    # Bytes per row of L elements: z+z2 double-buffered, 3 label streams
    # double-buffered, resident f32 accumulator (x2 safety).
    per_row = (2 * C * (z_bytes + z2_bytes) + 2 * 3 * lbl_bytes + 2 * C * 4) * L

    t_r = int(budget // per_row)
    t_r = min(t_r, max(8, max_lanes // L))
    t_r = max(8, (t_r // 8) * 8)
    if t_r >= R:
        t_r = R              # full-extent block (legal for any R)
    n_blk = pl.cdiv(R, t_r)

    footprint = per_row * t_r
    vmem_limit = int(min(max(footprint + (8 << 20), 32 << 20),
                         max(vmem_cap - (4 << 20), 32 << 20)))

    # Free reshapes + cheap narrow casts of the small label/condition maps.
    z_r = z.reshape(B, C, R, L)
    z2_r = z2.reshape(B, C, R, L)
    cond_r = condition.astype(lbl_dtype).reshape(B, 1, R, L)
    l_r = l.astype(lbl_dtype).reshape(B, 1, R, L)
    lt_r = l_target.astype(lbl_dtype).reshape(B, 1, R, L)

    kernel = functools.partial(_targeted_loss_kernel, total_rows=R)

    partial_out = pl.pallas_call(
        kernel,
        out_shape=jax.ShapeDtypeStruct((B, C, t_r, L), jnp.float32),
        grid_spec=pltpu.PrefetchScalarGridSpec(
            num_scalar_prefetch=0,
            grid=(B, n_blk),
            in_specs=[
                pl.BlockSpec((1, 1, t_r, L), lambda b, j: (b, 0, j, 0)),  # cond
                pl.BlockSpec((1, 1, t_r, L), lambda b, j: (b, 0, j, 0)),  # l
                pl.BlockSpec((1, 1, t_r, L), lambda b, j: (b, 0, j, 0)),  # l_target
                pl.BlockSpec((1, C, t_r, L), lambda b, j: (b, 0, j, 0)),  # z
                pl.BlockSpec((1, C, t_r, L), lambda b, j: (b, 0, j, 0)),  # z2
            ],
            # Per-batch accumulator block, resident across the spatial axis.
            out_specs=pl.BlockSpec((1, C, t_r, L), lambda b, j: (b, 0, 0, 0)),
        ),
        compiler_params=pltpu.CompilerParams(
            dimension_semantics=("parallel", "arbitrary"),
            vmem_limit_bytes=vmem_limit,
        ),
    )(cond_r, l_r, lt_r, z_r, z2_r)

    # Tiny final reduction of the per-batch partial accumulators.
    return jnp.sum(partial_out)


def _reference_loss(z, z2, condition, l, l_target):
    """Pure-JAX reference mirroring the PyTorch fancy-index gather."""
    zsum = (z + z2).astype(jnp.float32)                                   # (B,C,H,W)
    good = jnp.take_along_axis(zsum, l[:, None, :, :], axis=1)[:, 0]      # (B,H,W)
    bad = jnp.take_along_axis(zsum, l_target[:, None, :, :], axis=1)[:, 0]
    return jnp.sum(jnp.where(condition, good - bad, 0.0))


if __name__ == "__main__":
    # targetedLoss has no learnable parameters (empty __init__), so only inputs.
    B, C, H, W = 2, 4, 16, 16
    key = jax.random.PRNGKey(0)
    k_z, k_z2, k_c, k_l, k_lt = jax.random.split(key, 5)

    z = jax.random.normal(k_z, (B, C, H, W), dtype=jnp.float32)
    z2 = jax.random.normal(k_z2, (B, C, H, W), dtype=jnp.float32)
    condition = jax.random.bernoulli(k_c, p=0.5, shape=(B, H, W))
    l = jax.random.randint(k_l, (B, H, W), 0, C, dtype=jnp.int32)
    l_target = jax.random.randint(k_lt, (B, H, W), 0, C, dtype=jnp.int32)

    loss = targeted_loss(z, z2, condition, l, l_target)
    jax.block_until_ready(loss)

    ref = _reference_loss(z, z2, condition, l, l_target)
    jax.block_until_ready(ref)

    if not jnp.allclose(loss, ref, rtol=1e-5, atol=1e-4):
        raise AssertionError(f"mismatch: pallas={loss} ref={ref}")

    print("KERNEL_OK")
</pallas_src>

<mosaic_0001>
module attributes {stable_mosaic.version = 11 : i64} {
  func.func @_targeted_loss_kernel(%arg0: i32, %arg1: i32, %arg2: memref<1x1x2x128xi16, #tpu.memory_space<vmem>>, %arg3: memref<1x1x2x128xi16, #tpu.memory_space<vmem>>, %arg4: memref<1x1x2x128xi16, #tpu.memory_space<vmem>>, %arg5: memref<1x4x2x128xf32, #tpu.memory_space<vmem>>, %arg6: memref<1x4x2x128xf32, #tpu.memory_space<vmem>>, %arg7: memref<1x4x2x128xf32, #tpu.memory_space<vmem>>) attributes {dimension_semantics = [#tpu.dimension_semantics<parallel>, #tpu.dimension_semantics<arbitrary>], iteration_bounds = array<i64: 2, 1>, scalar_prefetch = 0 : i64, scratch_operands = 0 : i64, tpu.core_type = #tpu.core_type<tc>, window_params = [{transform_indices = @transform_0, window_bounds = array<i64: 1, 1, 2, 128>}, {transform_indices = @transform_1, window_bounds = array<i64: 1, 1, 2, 128>}, {transform_indices = @transform_2, window_bounds = array<i64: 1, 1, 2, 128>}, {transform_indices = @transform_3, window_bounds = array<i64: 1, 4, 2, 128>}, {transform_indices = @transform_4, window_bounds = array<i64: 1, 4, 2, 128>}, {transform_indices = @transform_5, window_bounds = array<i64: 1, 4, 2, 128>}]} {
    %c0_i32 = arith.constant 0 : i32
    %0 = arith.cmpi eq, %arg1, %c0_i32 : i32
    %1 = arith.extui %0 : i1 to i32
    %c0_i32_0 = arith.constant 0 : i32
    %2 = arith.cmpi ne, %1, %c0_i32_0 : i32
    scf.if %2 {
      %cst_32 = arith.constant 0.000000e+00 : f32
      %38 = vector.broadcast %cst_32 : f32 to vector<1x4x2x128xf32>
      %c0_33 = arith.constant 0 : index
      %c0_34 = arith.constant 0 : index
      %c0_35 = arith.constant 0 : index
      %c0_36 = arith.constant 0 : index
      %39 = vector.load %arg7[%c0_33, %c0_34, %c0_35, %c0_36] : memref<1x4x2x128xf32, #tpu.memory_space<vmem>>, vector<1x4x2x128xf32>
      tpu.vector_store %arg7[%c0_33, %c0_34, %c0_35, %c0_36], %38 {strides = array<i32>} : memref<1x4x2x128xf32, #tpu.memory_space<vmem>>, vector<1x4x2x128xf32>,
    } else {
    }
    %c0 = arith.constant 0 : index
    %c0_1 = arith.constant 0 : index
    %c0_2 = arith.constant 0 : index
    %c0_3 = arith.constant 0 : index
    %3 = vector.load %arg5[%c0, %c0_1, %c0_2, %c0_3] : memref<1x4x2x128xf32, #tpu.memory_space<vmem>>, vector<1x4x2x128xf32>
    %c0_4 = arith.constant 0 : index
    %c0_5 = arith.constant 0 : index
    %c0_6 = arith.constant 0 : index
    %c0_7 = arith.constant 0 : index
    %4 = vector.load %arg6[%c0_4, %c0_5, %c0_6, %c0_7] : memref<1x4x2x128xf32, #tpu.memory_space<vmem>>, vector<1x4x2x128xf32>
    %5 = arith.addf %3, %4 : vector<1x4x2x128xf32>
    %c0_8 = arith.constant 0 : index
    %c0_9 = arith.constant 0 : index
    %c0_10 = arith.constant 0 : index
    %c0_11 = arith.constant 0 : index
    %6 = vector.load %arg3[%c0_8, %c0_9, %c0_10, %c0_11] : memref<1x1x2x128xi16, #tpu.memory_space<vmem>>, vector<1x1x2x128xi16>
    %7 = arith.extsi %6 : vector<1x1x2x128xi16> to vector<1x1x2x128xi32>
    %c0_12 = arith.constant 0 : index
    %c0_13 = arith.constant 0 : index
    %c0_14 = arith.constant 0 : index
    %c0_15 = arith.constant 0 : index
    %8 = vector.load %arg4[%c0_12, %c0_13, %c0_14, %c0_15] : memref<1x1x2x128xi16, #tpu.memory_space<vmem>>, vector<1x1x2x128xi16>
    %9 = arith.extsi %8 : vector<1x1x2x128xi16> to vector<1x1x2x128xi32>
    %c0_16 = arith.constant 0 : index
    %c0_17 = arith.constant 0 : index
    %c0_18 = arith.constant 0 : index
    %c0_19 = arith.constant 0 : index
    %10 = vector.load %arg2[%c0_16, %c0_17, %c0_18, %c0_19] : memref<1x1x2x128xi16, #tpu.memory_space<vmem>>, vector<1x1x2x128xi16>
    %11 = arith.extsi %10 : vector<1x1x2x128xi16> to vector<1x1x2x128xi32>
    %12 = tpu.iota {dimensions = array<i32: 2>} : vector<1x1x2x128xi32>
    %c0_i32_20 = arith.constant 0 : i32
    %13 = vector.broadcast %c0_i32_20 : i32 to vector<1x1x2x128xi32>
    %14 = arith.cmpi ne, %11, %13 : vector<1x1x2x128xi32>
    %c2_i32 = arith.constant 2 : i32
    %15 = arith.muli %arg1, %c2_i32 : i32
    %16 = vector.broadcast %15 : i32 to vector<1x1x2x128xi32>
    %17 = arith.addi %16, %12 : vector<1x1x2x128xi32>
    %c2_i32_21 = arith.constant 2 : i32
    %18 = vector.broadcast %c2_i32_21 : i32 to vector<1x1x2x128xi32>
    %19 = arith.cmpi slt, %17, %18 : vector<1x1x2x128xi32>
    %20 = arith.andi %14, %19 : vector<1x1x2x128xi1>
    %cst = arith.constant 0.000000e+00 : f32
    %21 = vector.shape_cast %20 : vector<1x1x2x128xi1> to vector<1x1x2x128xi1>
    %22 = vector.broadcast %21 : vector<1x1x2x128xi1> to vector<1x4x2x128xi1>
    %23 = vector.broadcast %cst : f32 to vector<1x4x2x128xf32>
    %24 = arith.select %22, %5, %23 : vector<1x4x2x128xi1>, vector<1x4x2x128xf32>
    %25 = tpu.iota {dimensions = array<i32: 1>} : vector<1x4x2x128xi32>
    %c0_22 = arith.constant 0 : index
    %c0_23 = arith.constant 0 : index
    %c0_24 = arith.constant 0 : index
    %c0_25 = arith.constant 0 : index
    %26 = vector.load %arg7[%c0_22, %c0_23, %c0_24, %c0_25] : memref<1x4x2x128xf32, #tpu.memory_space<vmem>>, vector<1x4x2x128xf32>
    %27 = vector.broadcast %7 : vector<1x1x2x128xi32> to vector<1x4x2x128xi32>
    %28 = arith.cmpi eq, %25, %27 : vector<1x4x2x128xi32>
    %cst_26 = arith.constant 0.000000e+00 : f32
    %29 = vector.broadcast %cst_26 : f32 to vector<1x4x2x128xf32>
    %30 = arith.select %28, %24, %29 : vector<1x4x2x128xi1>, vector<1x4x2x128xf32>
    %31 = vector.broadcast %9 : vector<1x1x2x128xi32> to vector<1x4x2x128xi32>
    %32 = arith.cmpi eq, %25, %31 : vector<1x4x2x128xi32>
    %cst_27 = arith.constant 0.000000e+00 : f32
    %33 = vector.broadcast %cst_27 : f32 to vector<1x4x2x128xf32>
    %34 = arith.select %32, %24, %33 : vector<1x4x2x128xi1>, vector<1x4x2x128xf32>
    %35 = arith.subf %30, %34 : vector<1x4x2x128xf32>
    %36 = arith.addf %26, %35 : vector<1x4x2x128xf32>
    %c0_28 = arith.constant 0 : index
    %c0_29 = arith.constant 0 : index
    %c0_30 = arith.constant 0 : index
    %c0_31 = arith.constant 0 : index
    %37 = vector.load %arg7[%c0_28, %c0_29, %c0_30, %c0_31] : memref<1x4x2x128xf32, #tpu.memory_space<vmem>>, vector<1x4x2x128xf32>
    tpu.vector_store %arg7[%c0_28, %c0_29, %c0_30, %c0_31], %36 {strides = array<i32>} : memref<1x4x2x128xf32, #tpu.memory_space<vmem>>, vector<1x4x2x128xf32>,
    return
  }
  func.func @transform_0(%arg0: i32, %arg1: i32) -> (i32, i32, i32, i32) {
    %c0_i32 = arith.constant 0 : i32
    %c0_i32_0 = arith.constant 0 : i32
    %c0_i32_1 = arith.constant 0 : i32
    return %arg0, %c0_i32, %arg1, %c0_i32_0 : i32, i32, i32, i32
  }
  func.func @transform_1(%arg0: i32, %arg1: i32) -> (i32, i32, i32, i32) {
    %c0_i32 = arith.constant 0 : i32
    %c0_i32_0 = arith.constant 0 : i32
    %c0_i32_1 = arith.constant 0 : i32
    return %arg0, %c0_i32, %arg1, %c0_i32_0 : i32, i32, i32, i32
  }
  func.func @transform_2(%arg0: i32, %arg1: i32) -> (i32, i32, i32, i32) {
    %c0_i32 = arith.constant 0 : i32
    %c0_i32_0 = arith.constant 0 : i32
    %c0_i32_1 = arith.constant 0 : i32
    return %arg0, %c0_i32, %arg1, %c0_i32_0 : i32, i32, i32, i32
  }
  func.func @transform_3(%arg0: i32, %arg1: i32) -> (i32, i32, i32, i32) {
    %c0_i32 = arith.constant 0 : i32
    %c0_i32_0 = arith.constant 0 : i32
    %c0_i32_1 = arith.constant 0 : i32
    return %arg0, %c0_i32, %arg1, %c0_i32_0 : i32, i32, i32, i32
  }
  func.func @transform_4(%arg0: i32, %arg1: i32) -> (i32, i32, i32, i32) {
    %c0_i32 = arith.constant 0 : i32
    %c0_i32_0 = arith.constant 0 : i32
    %c0_i32_1 = arith.constant 0 : i32
    return %arg0, %c0_i32, %arg1, %c0_i32_0 : i32, i32, i32, i32
  }
  func.func @transform_5(%arg0: i32, %arg1: i32) -> (i32, i32, i32, i32) {
    %c0_i32 = arith.constant 0 : i32
    %c0_i32_0 = arith.constant 0 : i32
    %c0_i32_1 = arith.constant 0 : i32
    %c0_i32_2 = arith.constant 0 : i32
    return %arg0, %c0_i32, %c0_i32_0, %c0_i32_1 : i32, i32, i32, i32
  }
}

</mosaic_0001>

<llo_original>
// kernel: tpu_custom_call.1
$region0: #{tpu_custom_call.1}
  #allocation0 [shape = 'u32[]', space=smem, size = 0x4, offset = 0x4, fixed_abs, tag = 'smem constant byte address 0x4 - core index']
  #allocation1 [shape = 'u32[144,128]{1,0:T(1,128)}', space=vmem, size = 0x12000, scoped, tag = 'internal scratch']
  %s0 = inlined_call_operand.hbm [shape: s16[2,1,2,128], index: 0, kind: input, shape index: {}]
  %s1 = inlined_call_operand.hbm [shape: s16[2,1,2,128], index: 1, kind: input, shape index: {}]
  %s2 = inlined_call_operand.vmem [shape: s16[2,1,2,128], index: 2, kind: input, shape index: {}]
  %s3 = inlined_call_operand.hbm [shape: f32[2,4,2,128], index: 3, kind: input, shape index: {}]
  %s4 = inlined_call_operand.hbm [shape: f32[2,4,2,128], index: 4, kind: input, shape index: {}]
  %s5 = inlined_call_operand.hbm [shape: f32[2,4,2,128], index: 5, kind: output, shape index: {}]
  %s6 = sld [smem:[#allocation0]]
  $region73: #{tpu_custom_call.1} parent=0
    _
  %s8 = ssub.s32 1, %s6
  %s9 = scalar_select 0, %s8, %s6
  $region1: #{tpu_custom_call.1} parent=0
    #allocation2 [shape = 'u8[1024]{0}', space=vmem, size = 0x400, scoped, tag = 'input window, operand 0']
    #allocation3 [shape = 's32[2]{0}', space=sflag, size = 0x8, scoped, tag = 'scoped memory for tpu_custom_call.1']
    #allocation4 [shape = 's32[2]{0}', space=sflag, size = 0x8, scoped, tag = 'scoped memory for tpu_custom_call.1']
    #allocation5 [shape = 'u8[1024]{0}', space=vmem, size = 0x400, scoped, tag = 'input window, operand 1']
    #allocation6 [shape = 's32[2]{0}', space=sflag, size = 0x8, scoped, tag = 'scoped memory for tpu_custom_call.1']
    #allocation7 [shape = 'u8[8192]{0}', space=vmem, size = 0x2000, scoped, tag = 'input window, operand 3']
    #allocation8 [shape = 'u8[8192]{0}', space=vmem, size = 0x2000, scoped, tag = 'input window, operand 4']
    #allocation9 [shape = 's32[2]{0}', space=sflag, size = 0x8, scoped, tag = 'scoped memory for tpu_custom_call.1']
    #allocation10 [shape = 'u8[8192]{0}', space=vmem, size = 0x2000, scoped, tag = 'output window, operand 0']
    %10 = vsyncpa [#allocation3], 0
    %s11 = scalar_lea.sflag [#allocation3], 1
    %12 = vsyncpa %s11, 0
    %13 = vsyncpa [#allocation6], 0
    %s14 = scalar_lea.sflag [#allocation6], 1
    %15 = vsyncpa %s14, 0
    %16 = vsyncpa [#allocation9], 0
    %s17 = scalar_lea.sflag [#allocation9], 1
    %18 = vsyncpa %s17, 0
    %19 = vsyncpa [#allocation4], 0
    %s20 = scalar_lea.sflag [#allocation4], 1
    %21 = vsyncpa %s20, 0
    loop: start=0, step=1, limit=4
    $region2: #{tpu_custom_call.1} parent=1 // loop_pre_header
      _
    $region3: #{tpu_custom_call.1} parent=1 // loop_header
      %s23 = sphi 0, %s27
      %p24 = scmp.ge.s32.totalorder %s23, 4
      %s30 = sphi 0, %s42
      %s31 = sphi 0, %s38
      %s32 = sphi 0, %s30
      %s33 = sphi 0, %s31
      %s34 = sphi 0, %s32
      %s35 = sphi 0, %s33
      %s47 = sphi 0, %s49
      %s50 = sphi 0, %s47
      %s51 = sphi 0, %s50
      %s67 = sphi 0, %s51
      %s75 = sphi 0, %s77
      %s78 = sphi 0, %s75
      %s79 = sphi 0, %s78
      %s95 = sphi 0, %s79
      %s103 = sphi 0, %s105
      %s106 = sphi 0, %s103
      %s107 = sphi 0, %s106
      %s123 = sphi 0, %s107
      %s131 = sphi 0, %s133
      %s134 = sphi 0, %s131
      %s135 = sphi 0, %s134
      %s151 = sphi 0, %s135
      %s159 = sphi 0, %s161
      %s162 = sphi 0, %s159
      %s163 = sphi 0, %s162
      %s179 = sphi 0, %s163
      %s185 = sphi 0, %s187
      %s188 = sphi 0, %s185
      %s189 = sphi 0, %s188
      %s205 = sphi 0, %s189
    $region4: #{tpu_custom_call.1} parent=1 // loop_header_branch
      %26 = sbr.rel (%p24) target = $region8
    $region5: #{tpu_custom_call.1} parent=1 // loop_body
      %s28 = ssub.s32 %s23, 1
      %s29 = ssub.s32 %s23, 2
      %s36 = sadd.s32 1, %s31
      %p37 = scmp.ge.s32.totalorder %s36, 1
      %s38 = scalar_select %p37, 0, %s36
      %s39 = sadd.s32 1, %s30
      %s40 = scalar_select %p37, %s39, %s30
      %p41 = scmp.ge.s32.totalorder %s40, 2
      %s42 = scalar_select %p41, 0, %s40
      %s43 = ssub.s32 %s30, %s42
      %s44 = ssub.s32 %s31, %s38
      %s45 = sor.u32 %s43, %s44
      %p46 = scmp.eq.s32.totalorder %s45, 0
      %s48 = sadd.s32 %s47, 1
      %s49 = scalar_select %p46, %s47, %s48
      %p52 = pneg %p46
      %p53 = scmp.eq.s32.totalorder %s23, 1
      %p54 = por %p52, %p53
      %p55 = scmp.ne.s32.totalorder %s47, %s50
      %p56 = scmp.eq.s32.totalorder %s23, 0
      %p57 = por %p55, %p56
      %p58 = scmp.ne.s32.totalorder %s47, %s50
      %p59 = scmp.eq.s32.totalorder %s28, 1
      %p60 = por %p58, %p59
      %p61 = scmp.ne.s32.totalorder %s50, %s51
      %p62 = scmp.eq.s32.totalorder %s28, 0
      %p63 = por %p61, %p62
      %p64 = scmp.ne.s32.totalorder %s50, %s51
      %p65 = scmp.eq.s32.totalorder %s29, 1
      %p66 = por %p64, %p65
      %p68 = scmp.ne.s32.totalorder %s51, %s67
      %p69 = scmp.eq.s32.totalorder %s29, 0
      %p70 = por %p68, %p69
      %s71 = ssub.s32 %s30, %s42
      %s72 = ssub.s32 %s31, %s38
      %s73 = sor.u32 %s71, %s72
      %p74 = scmp.eq.s32.totalorder %s73, 0
      %s76 = sadd.s32 %s75, 1
      %s77 = scalar_select %p74, %s75, %s76
      %p80 = pneg %p74
      %p81 = scmp.eq.s32.totalorder %s23, 1
      %p82 = por %p80, %p81
      %p83 = scmp.ne.s32.totalorder %s75, %s78
      %p84 = scmp.eq.s32.totalorder %s23, 0
      %p85 = por %p83, %p84
      %p86 = scmp.ne.s32.totalorder %s75, %s78
      %p87 = scmp.eq.s32.totalorder %s28, 1
      %p88 = por %p86, %p87
      %p89 = scmp.ne.s32.totalorder %s78, %s79
      %p90 = scmp.eq.s32.totalorder %s28, 0
      %p91 = por %p89, %p90
      %p92 = scmp.ne.s32.totalorder %s78, %s79
      %p93 = scmp.eq.s32.totalorder %s29, 1
      %p94 = por %p92, %p93
      %p96 = scmp.ne.s32.totalorder %s79, %s95
      %p97 = scmp.eq.s32.totalorder %s29, 0
      %p98 = por %p96, %p97
      %s99 = ssub.s32 %s30, %s42
      %s100 = ssub.s32 %s31, %s38
      %s101 = sor.u32 %s99, %s100
      %p102 = scmp.eq.s32.totalorder %s101, 0
      %s104 = sadd.s32 %s103, 1
      %s105 = scalar_select %p102, %s103, %s104
      %p108 = pneg %p102
      %p109 = scmp.eq.s32.totalorder %s23, 1
      %p110 = por %p108, %p109
      %p111 = scmp.ne.s32.totalorder %s103, %s106
      %p112 = scmp.eq.s32.totalorder %s23, 0
      %p113 = por %p111, %p112
      %p114 = scmp.ne.s32.totalorder %s103, %s106
      %p115 = scmp.eq.s32.totalorder %s28, 1
      %p116 = por %p114, %p115
      %p117 = scmp.ne.s32.totalorder %s106, %s107
      %p118 = scmp.eq.s32.totalorder %s28, 0
      %p119 = por %p117, %p118
      %p120 = scmp.ne.s32.totalorder %s106, %s107
      %p121 = scmp.eq.s32.totalorder %s29, 1
      %p122 = por %p120, %p121
      %p124 = scmp.ne.s32.totalorder %s107, %s123
      %p125 = scmp.eq.s32.totalorder %s29, 0
      %p126 = por %p124, %p125
      %s127 = ssub.s32 %s30, %s42
      %s128 = ssub.s32 %s31, %s38
      %s129 = sor.u32 %s127, %s128
      %p130 = scmp.eq.s32.totalorder %s129, 0
      %s132 = sadd.s32 %s131, 1
      %s133 = scalar_select %p130, %s131, %s132
      %p136 = pneg %p130
      %p137 = scmp.eq.s32.totalorder %s23, 1
      %p138 = por %p136, %p137
      %p139 = scmp.ne.s32.totalorder %s131, %s134
      %p140 = scmp.eq.s32.totalorder %s23, 0
      %p141 = por %p139, %p140
      %p142 = scmp.ne.s32.totalorder %s131, %s134
      %p143 = scmp.eq.s32.totalorder %s28, 1
      %p144 = por %p142, %p143
      %p145 = scmp.ne.s32.totalorder %s134, %s135
      %p146 = scmp.eq.s32.totalorder %s28, 0
      %p147 = por %p145, %p146
      %p148 = scmp.ne.s32.totalorder %s134, %s135
      %p149 = scmp.eq.s32.totalorder %s29, 1
      %p150 = por %p148, %p149
      %p152 = scmp.ne.s32.totalorder %s135, %s151
      %p153 = scmp.eq.s32.totalorder %s29, 0
      %p154 = por %p152, %p153
      %s155 = ssub.s32 %s30, %s42
      %s156 = ssub.s32 %s31, %s38
      %s157 = sor.u32 %s155, %s156
      %p158 = scmp.eq.s32.totalorder %s157, 0
      %s160 = sadd.s32 %s159, 1
      %s161 = scalar_select %p158, %s159, %s160
      %p164 = pneg %p158
      %p165 = scmp.eq.s32.totalorder %s23, 1
      %p166 = por %p164, %p165
      %p167 = scmp.ne.s32.totalorder %s159, %s162
      %p168 = scmp.eq.s32.totalorder %s23, 0
      %p169 = por %p167, %p168
      %p170 = scmp.ne.s32.totalorder %s159, %s162
      %p171 = scmp.eq.s32.totalorder %s28, 1
      %p172 = por %p170, %p171
      %p173 = scmp.ne.s32.totalorder %s162, %s163
      %p174 = scmp.eq.s32.totalorder %s28, 0
      %p175 = por %p173, %p174
      %p176 = scmp.ne.s32.totalorder %s162, %s163
      %p177 = scmp.eq.s32.totalorder %s29, 1
      %p178 = por %p176, %p177
      %p180 = scmp.ne.s32.totalorder %s163, %s179
      %p181 = scmp.eq.s32.totalorder %s29, 0
      %p182 = por %p180, %p181
      %s183 = ssub.s32 %s30, %s42
      %p184 = scmp.eq.s32.totalorder %s183, 0
      %s186 = sadd.s32 %s185, 1
      %s187 = scalar_select %p184, %s185, %s186
      %p190 = pneg %p184
      %p191 = scmp.eq.s32.totalorder %s23, 1
      %p192 = por %p190, %p191
      %p193 = scmp.ne.s32.totalorder %s185, %s188
      %p194 = scmp.eq.s32.totalorder %s23, 0
      %p195 = por %p193, %p194
      %p196 = scmp.ne.s32.totalorder %s185, %s188
      %p197 = scmp.eq.s32.totalorder %s28, 1
      %p198 = por %p196, %p197
      %p199 = scmp.ne.s32.totalorder %s188, %s189
      %p200 = scmp.eq.s32.totalorder %s28, 0
      %p201 = por %p199, %p200
      %p202 = scmp.ne.s32.totalorder %s188, %s189
      %p203 = scmp.eq.s32.totalorder %s29, 1
      %p204 = por %p202, %p203
      %p206 = scmp.ne.s32.totalorder %s189, %s205
      %p207 = scmp.eq.s32.totalorder %s29, 0
      %p208 = por %p206, %p207
      %p209 = scmp.le.s32.totalorder 1, %s23
      %p210 = scmp.lt.s32.totalorder %s23, 3
      %p211 = pnand %p209, %p210
      %p212 = pneg %p211
      // Predicated region
      $region9: #{tpu_custom_call.1} parent=5 // pred_check
        _
      $region10: #{tpu_custom_call.1} parent=5 // pred_check_branch
        %214 = sbr.rel (%p211) target = $region12
      $region11: #{tpu_custom_call.1} parent=5 // pred_region
        %s215 = ssub.s32 %s23, 1
      $region12: #{tpu_custom_call.1} parent=5 // pred_fallthru
        _
      %p216 = scmp.lt.s32.totalorder %s23, 2
      // Predicated region
      $region13: #{tpu_custom_call.1} parent=5 // pred_check
        %p217 = pneg %p216
      $region14: #{tpu_custom_call.1} parent=5 // pred_check_branch
        %219 = sbr.rel (%p217) target = $region16
      $region15: #{tpu_custom_call.1} parent=5 // pred_region
        // Predicated region
        $region17: #{tpu_custom_call.1} parent=15 // pred_check
          %p220 = pneg %p57
        $region18: #{tpu_custom_call.1} parent=15 // pred_check_branch
          %222 = sbr.rel (%p220) target = $region20
        $region19: #{tpu_custom_call.1} parent=15 // pred_region
          %s223 = sand.u32 %s47, 1
          %s224 = scalar_lea.sflag [#allocation3], %s223
          %s225 = sand.u32 %s47, 1
          %s226 = scalar_lea.vmem [#allocation2], %s225
          %s228 = ssub.s32 16, 16
          %229 = vsyncadd %s224, %s228
          %s230 = sadd.s32 %s31, %s30
          %s231 = smul.addr %s230, 16
          %s232 = scalar_lea.hbm %s0, %s231
          %s234 = sshll.u32 %s226, 4
          %s235 = int_to_ptr.vmem [resolvable:$true] %s234
          %237 = dma.hbm_to_vmem [thread:$0]  %s232, 16, %s235, %s224
        $region20: #{tpu_custom_call.1} parent=15 // pred_fallthru
          _
        // Predicated region
        $region21: #{tpu_custom_call.1} parent=15 // pred_check
          %p238 = pneg %p85
        $region22: #{tpu_custom_call.1} parent=15 // pred_check_branch
          %240 = sbr.rel (%p238) target = $region24
        $region23: #{tpu_custom_call.1} parent=15 // pred_region
          %s241 = sand.u32 %s23, 1
          %s242 = scalar_lea.sflag [#allocation6], %s241
          %s243 = sand.u32 %s75, 1
          %s244 = scalar_lea.vmem [#allocation5], %s243
          %s246 = ssub.s32 16, 16
          %247 = vsyncadd %s242, %s246
          %s248 = sadd.s32 %s31, %s30
          %s249 = smul.addr %s248, 16
          %s250 = scalar_lea.hbm %s1, %s249
          %s252 = sshll.u32 %s244, 4
          %s253 = int_to_ptr.vmem [resolvable:$true] %s252
          %255 = dma.hbm_to_vmem [thread:$0]  %s250, 16, %s253, %s242
        $region24: #{tpu_custom_call.1} parent=15 // pred_fallthru
          _
        // Predicated region
        $region25: #{tpu_custom_call.1} parent=15 // pred_check
          %p256 = pneg %p113
        $region26: #{tpu_custom_call.1} parent=15 // pred_check_branch
          %258 = sbr.rel (%p256) target = $region28
        $region27: #{tpu_custom_call.1} parent=15 // pred_region
          %p259 = scmp.lt.s32.totalorder %s30, 1
          %s260 = scalar_select %p259, %s30, 1
          %p261 = scmp.lt.s32.totalorder %s31, 0
          %s262 = scalar_select %p261, %s31, 0
          %s263 = sadd.s32 %s262, %s260
          %s264 = scalar_lea.vmem %s2, %s263
        $region28: #{tpu_custom_call.1} parent=15 // pred_fallthru
          _
        // Predicated region
        $region29: #{tpu_custom_call.1} parent=15 // pred_check
          %p265 = pneg %p141
        $region30: #{tpu_custom_call.1} parent=15 // pred_check_branch
          %267 = sbr.rel (%p265) target = $region32
        $region31: #{tpu_custom_call.1} parent=15 // pred_region
          %s268 = sand.u32 %s23, 1
          %s269 = scalar_lea.sflag [#allocation6], %s268
          %s270 = sand.u32 %s131, 1
          %s271 = smul.addr %s270, 8
          %s272 = scalar_lea.vmem [#allocation7], %s271
          %s274 = ssub.s32 128, 128
          %275 = vsyncadd %s269, %s274
          %s276 = smul.addr %s30, 4
          %s277 = sadd.s32 %s31, %s276
          %s278 = smul.addr %s277, 32
          %s279 = scalar_lea.hbm %s3, %s278
          %s280 = sshll.u32 %s272, 4
          %s281 = int_to_ptr.vmem [resolvable:$true] %s280
          %286 = dma.hbm_to_vmem [thread:$0]  %s279, 128, %s281, %s269, 32, 32, 2
        $region32: #{tpu_custom_call.1} parent=15 // pred_fallthru
          _
        // Predicated region
        $region33: #{tpu_custom_call.1} parent=15 // pred_check
          %p287 = pneg %p169
        $region34: #{tpu_custom_call.1} parent=15 // pred_check_branch
          %289 = sbr.rel (%p287) target = $region36
        $region35: #{tpu_custom_call.1} parent=15 // pred_region
          %s290 = sand.u32 %s159, 1
          %s291 = scalar_lea.sflag [#allocation9], %s290
          %s292 = sand.u32 %s159, 1
          %s293 = smul.addr %s292, 8
          %s294 = scalar_lea.vmem [#allocation8], %s293
          %s296 = ssub.s32 128, 128
          %297 = vsyncadd %s291, %s296
          %s298 = smul.addr %s30, 4
          %s299 = sadd.s32 %s31, %s298
          %s300 = smul.addr %s299, 32
          %s301 = scalar_lea.hbm %s4, %s300
          %s302 = sshll.u32 %s294, 4
          %s303 = int_to_ptr.vmem [resolvable:$true] %s302
          %308 = dma.hbm_to_vmem [thread:$0]  %s301, 128, %s303, %s291, 32, 32, 2
        $region36: #{tpu_custom_call.1} parent=15 // pred_fallthru
          _
      $region16: #{tpu_custom_call.1} parent=5 // pred_fallthru
        _
      %p309 = scmp.le.s32.totalorder 1, %s23
      %p310 = scmp.lt.s32.totalorder %s23, 3
      %p311 = pnand %p309, %p310
      %p312 = pneg %p311
      // Predicated region
      $region37: #{tpu_custom_call.1} parent=5 // pred_check
        _
      $region38: #{tpu_custom_call.1} parent=5 // pred_check_branch
        %314 = sbr.rel (%p311) target = $region40
      $region39: #{tpu_custom_call.1} parent=5 // pred_region
        %s315 = ssub.s32 %s23, 1
        %s316 = sand.u32 %s50, 1
        %s317 = scalar_lea.sflag [#allocation3], %s316
        %s318 = sand.u32 %s50, 1
        %s319 = scalar_lea.vmem [#allocation2], %s318
        // Predicated region
        $region41: #{tpu_custom_call.1} parent=39 // pred_check
          %p320 = pneg %p63
        $region42: #{tpu_custom_call.1} parent=39 // pred_check_branch
          %322 = sbr.rel (%p320) target = $region44
        $region43: #{tpu_custom_call.1} parent=39 // pred_region
          %323 = dma.done %s317, 16
        $region44: #{tpu_custom_call.1} parent=39 // pred_fallthru
          _
        %s324 = sand.u32 %s28, 1
        %s325 = scalar_lea.sflag [#allocation6], %s324
        %s326 = sand.u32 %s78, 1
        %s327 = scalar_lea.vmem [#allocation5], %s326
        // Predicated region
        $region45: #{tpu_custom_call.1} parent=39 // pred_check
          %p328 = pneg %p91
        $region46: #{tpu_custom_call.1} parent=39 // pred_check_branch
          %330 = sbr.rel (%p328) target = $region48
        $region47: #{tpu_custom_call.1} parent=39 // pred_region
          %331 = dma.done %s325, 16
        $region48: #{tpu_custom_call.1} parent=39 // pred_fallthru
          _
        %s332 = sand.u32 %s28, 1
        %s333 = scalar_lea.sflag [#allocation6], %s332
        %s334 = sand.u32 %s134, 1
        %s335 = smul.addr %s334, 8
        %s336 = scalar_lea.vmem [#allocation7], %s335
        // Predicated region
        $region49: #{tpu_custom_call.1} parent=39 // pred_check
          %p337 = pneg %p147
        $region50: #{tpu_custom_call.1} parent=39 // pred_check_branch
          %339 = sbr.rel (%p337) target = $region52
        $region51: #{tpu_custom_call.1} parent=39 // pred_region
          %340 = dma.done %s333, 128
        $region52: #{tpu_custom_call.1} parent=39 // pred_fallthru
          _
        %s341 = sand.u32 %s162, 1
        %s342 = scalar_lea.sflag [#allocation9], %s341
        %s343 = sand.u32 %s162, 1
        %s344 = smul.addr %s343, 8
        %s345 = scalar_lea.vmem [#allocation8], %s344
        // Predicated region
        $region53: #{tpu_custom_call.1} parent=39 // pred_check
          %p346 = pneg %p175
        $region54: #{tpu_custom_call.1} parent=39 // pred_check_branch
          %348 = sbr.rel (%p346) target = $region56
        $region55: #{tpu_custom_call.1} parent=39 // pred_region
          %349 = dma.done %s342, 128
        $region56: #{tpu_custom_call.1} parent=39 // pred_fallthru
          _
        %s350 = sand.u32 %s50, 1
        %s351 = scalar_lea.sflag [#allocation3], %s350
        %s352 = sand.u32 %s50, 1
        %s353 = scalar_lea.vmem [#allocation2], %s352
        %p354 = pneg %p63
        %p355 = pneg %p60
        %s356 = sand.u32 %s28, 1
        %s357 = scalar_lea.sflag [#allocation6], %s356
        %s358 = sand.u32 %s78, 1
        %s359 = scalar_lea.vmem [#allocation5], %s358
        %p360 = pneg %p91
        %p361 = pneg %p88
        %p362 = scmp.lt.s32.totalorder %s32, 1
        %s363 = scalar_select %p362, %s32, 1
        %p364 = scmp.lt.s32.totalorder %s33, 0
        %s365 = scalar_select %p364, %s33, 0
        %s366 = sadd.s32 %s365, %s363
        %s367 = scalar_lea.vmem %s2, %s366
        %p368 = pneg %p119
        %p369 = pneg %p116
        %s370 = sand.u32 %s28, 1
        %s371 = scalar_lea.sflag [#allocation6], %s370
        %s372 = sand.u32 %s134, 1
        %s373 = smul.addr %s372, 8
        %s374 = scalar_lea.vmem [#allocation7], %s373
        %p375 = pneg %p147
        %p376 = pneg %p144
        %s377 = sand.u32 %s162, 1
        %s378 = scalar_lea.sflag [#allocation9], %s377
        %s379 = sand.u32 %s162, 1
        %s380 = smul.addr %s379, 8
        %s381 = scalar_lea.vmem [#allocation8], %s380
        %p382 = pneg %p175
        %p383 = pneg %p172
        %p384 = pneg %p201
        %p385 = pneg %p198
        %s386 = sand.u32 %s188, 1
        %s387 = scalar_lea.sflag [#allocation4], %s386
        %s388 = sand.u32 %s188, 1
        %s389 = smul.addr %s388, 8
        %s390 = scalar_lea.vmem [#allocation10], %s389
        %p391 = scmp.lt.s32.totalorder %s32, 1
        %s392 = scalar_select %p391, %s32, 1
        %p393 = scmp.lt.s32.totalorder %s33, 0
        %s394 = scalar_select %p393, %s33, 0
        %s395 = sadd.s32 %s394, %s392
        %s396 = scalar_lea.vmem %s2, %s395
        %p397 = scmp.eq.s32.totalorder %s33, 0
        // Predicated region
        $region57: #{tpu_custom_call.1} parent=39 // pred_check
          %p398 = pneg %p397
        $region58: #{tpu_custom_call.1} parent=39 // pred_check_branch
          %400 = sbr.rel (%p398) target = $region60
        $region59: #{tpu_custom_call.1} parent=39 // pred_region
          %401 = vst [vmem:[%s390] sm:$0x3] 0.0
          %402 = vst [vmem:[%s390 + $0x2] sm:$0x3] 0.0
          %403 = vst [vmem:[%s390 + $0x4] sm:$0x3] 0.0
          %404 = vst [vmem:[%s390 + $0x6] sm:$0x3] 0.0
        $region60: #{tpu_custom_call.1} parent=39 // pred_fallthru
          _
        %v405 = vld [vmem:[%s336] sm:$0x3]
        %v406 = vld [vmem:[%s336 + $0x2] sm:$0x3]
        %v407 = vld [vmem:[%s336 + $0x4] sm:$0x3]
        %v408 = vld [vmem:[%s336 + $0x6] sm:$0x3]
        %v409 = vld [vmem:[%s345] sm:$0x3]
        %v410 = vld [vmem:[%s345 + $0x2] sm:$0x3]
        %v411 = vld [vmem:[%s345 + $0x4] sm:$0x3]
        %v412 = vld [vmem:[%s345 + $0x6] sm:$0x3]
        %v413 = vadd.f32 %v405, %v409
        %v414 = vadd.f32 %v406, %v410
        %v415 = vadd.f32 %v407, %v411
        %v416 = vadd.f32 %v408, %v412
        %v417 = vld [vmem:[%s327] sm:$0x1]
        %v418 = vunpack.c.l.b16 %v417
        %v419 = vld [vmem:[%s396] sm:$0x1]
        %v420 = vunpack.c.l.b16 %v419
        %v421 = vld [vmem:[%s319] sm:$0x1]
        %v422 = vunpack.c.l.b16 %v421
        %v423 = vlaneseq
        %v424 = vshrl.u32 %v423, 7
        %vm425 = vcmp.ne.s32.totalorder %v422, 0
        %s426 = smul.u32 %s33, 2
        %v427 = vstv %s426
        %v428 = vadd.s32 %v427, %v424
        %vm429 = vcmp.lt.s32.totalorder %v428, 2
        %vm430 = vmand %vm425, %vm429
        %v431 = vsel %vm430, 1, 0
        %vm432 = vcmp.eq.s32.totalorder %v431, 1
        %v433 = vsel %vm432, %v413, 0.0
        %v434 = vsel %vm432, %v414, 0.0
        %v435 = vsel %vm432, %v415, 0.0
        %v436 = vsel %vm432, %v416, 0.0
        %v437 = vld [vmem:[%s390] sm:$0x3]
        %v438 = vld [vmem:[%s390 + $0x2] sm:$0x3]
        %v439 = vld [vmem:[%s390 + $0x4] sm:$0x3]
        %v440 = vld [vmem:[%s390 + $0x6] sm:$0x3]
        %vm441 = vcmp.eq.s32.totalorder %v418, 0
        %vm442 = vcmp.eq.s32.totalorder %v418, 1
        %vm443 = vcmp.eq.s32.totalorder %v418, 2
        %vm444 = vcmp.eq.s32.totalorder %v418, 3
        %v445 = vsel %vm441, %v433, 0.0
        %v446 = vsel %vm442, %v434, 0.0
        %v447 = vsel %vm443, %v435, 0.0
        %v448 = vsel %vm444, %v436, 0.0
        %vm449 = vcmp.eq.s32.totalorder %v420, 0
        %vm450 = vcmp.eq.s32.totalorder %v420, 1
        %vm451 = vcmp.eq.s32.totalorder %v420, 2
        %vm452 = vcmp.eq.s32.totalorder %v420, 3
        %v453 = vsel %vm449, %v433, 0.0
        %v454 = vsel %vm450, %v434, 0.0
        %v455 = vsel %vm451, %v435, 0.0
        %v456 = vsel %vm452, %v436, 0.0
        %v457 = vsub.f32 %v445, %v453
        %v458 = vsub.f32 %v446, %v454
        %v459 = vsub.f32 %v447, %v455
        %v460 = vsub.f32 %v448, %v456
        %v461 = vadd.f32 %v437, %v457
        %v462 = vadd.f32 %v438, %v458
        %v463 = vadd.f32 %v439, %v459
        %v464 = vadd.f32 %v440, %v460
        %465 = vst [vmem:[%s390] sm:$0x3] %v461
        %466 = vst [vmem:[%s390 + $0x2] sm:$0x3] %v462
        %467 = vst [vmem:[%s390 + $0x4] sm:$0x3] %v463
        %468 = vst [vmem:[%s390 + $0x6] sm:$0x3] %v464
        %s469 = sand.u32 %s188, 1
        %s470 = scalar_lea.sflag [#allocation4], %s469
        %s471 = sand.u32 %s188, 1
        %s472 = smul.addr %s471, 8
        %s473 = scalar_lea.vmem [#allocation10], %s472
        // Predicated region
        $region61: #{tpu_custom_call.1} parent=39 // pred_check
          %p474 = pneg %p198
        $region62: #{tpu_custom_call.1} parent=39 // pred_check_branch
          %476 = sbr.rel (%p474) target = $region64
        $region63: #{tpu_custom_call.1} parent=39 // pred_region
          %s478 = ssub.s32 128, 128
          %479 = vsyncadd %s470, %s478
          %s480 = smul.addr %s32, 4
          %s481 = smul.addr %s480, 32
          %s482 = scalar_lea.hbm %s5, %s481
          %s483 = sshll.u32 %s473, 4
          %s484 = int_to_ptr.vmem [resolvable:$true] %s483
          %489 = dma.vmem_to_hbm [thread:$0]  %s484, 128, %s482, %s470, 32, 32, 2
        $region64: #{tpu_custom_call.1} parent=39 // pred_fallthru
          _
      $region40: #{tpu_custom_call.1} parent=5 // pred_fallthru
        _
      %p490 = scmp.le.s32.totalorder 2, %s23
      // Predicated region
      $region65: #{tpu_custom_call.1} parent=5 // pred_check
        %p491 = pneg %p490
      $region66: #{tpu_custom_call.1} parent=5 // pred_check_branch
        %493 = sbr.rel (%p491) target = $region68
      $region67: #{tpu_custom_call.1} parent=5 // pred_region
        %s494 = ssub.s32 %s23, 2
        // Predicated region
        $region69: #{tpu_custom_call.1} parent=67 // pred_check
          %p495 = pneg %p204
        $region70: #{tpu_custom_call.1} parent=67 // pred_check_branch
          %497 = sbr.rel (%p495) target = $region72
        $region71: #{tpu_custom_call.1} parent=67 // pred_region
          %s498 = sand.u32 %s189, 1
          %s499 = scalar_lea.sflag [#allocation4], %s498
          %s500 = sand.u32 %s189, 1
          %s501 = smul.addr %s500, 8
          %s502 = scalar_lea.vmem [#allocation10], %s501
          %503 = dma.done %s499, 128
        $region72: #{tpu_custom_call.1} parent=67 // pred_fallthru
          _
      $region68: #{tpu_custom_call.1} parent=5 // pred_fallthru
        _
    $region6: #{tpu_custom_call.1} parent=1 // loop_footer
      %s27 = sadd.s32 1, %s23
    $region7: #{tpu_custom_call.1} parent=1 // loop_footer_branch
      %22 = sbr.rel target = $region3
    $region8: #{tpu_custom_call.1} parent=1 // loop_exit
      _
    %504 = vsyncpa [#allocation3], 1
    %s505 = scalar_lea.sflag [#allocation3], 1
    %506 = vsyncpa %s505, 1
    %507 = vsyncpa [#allocation6], 1
    %s508 = scalar_lea.sflag [#allocation6], 1
    %509 = vsyncpa %s508, 1
    %510 = vsyncpa [#allocation9], 1
    %s511 = scalar_lea.sflag [#allocation9], 1
    %512 = vsyncpa %s511, 1
    %513 = vsyncpa [#allocation4], 1
    %s514 = scalar_lea.sflag [#allocation4], 1
    %515 = vsyncpa %s514, 1

</llo_original>
